<compile_context>
chip_gen: v7x
topology: tpu7x:2x2x1
jax: 0.10.0
libtpu: 0.0.40
codegen_flags: <defaults>
</compile_context>

<pallas_src>
import jax
import jax.numpy as jnp
from jax import lax
from jax.experimental import pallas as pl
from jax.experimental.pallas import tpu as pltpu

ALPHA = 0.25
GAMMA = 2.0  # kernel hard-codes gamma == 2.0 via explicit squares

_LANES = 128
_SUBLANES = 8
_MAX_TILE_ROWS = 4096   # 4096x128 f32 = 2 MiB/tile; 2 inputs x 2 buffers = 8 MiB.
_NUM_SPLITS = 2         # leading "parallel" axis for v7x's 2 TensorCores.


def _round_up(x, m):
    return -(-x // m) * m


def _make_kernel(steps, total_blocks, tile_rows, rows_arr):
    blocks_even = (steps * _NUM_SPLITS == total_blocks)
    needs_mask = (rows_arr % tile_rows != 0)

    def kernel(p_ref, t_ref, bce_out_ref, w_out_ref, acc_bce_ref, acc_w_ref):
        s = pl.program_id(0)
        j = pl.program_id(1)

        @pl.when(j == 0)
        def _init():
            acc_bce_ref[...] = jnp.zeros_like(acc_bce_ref)
            acc_w_ref[...] = jnp.zeros_like(acc_w_ref)

        def _accumulate():
            p = p_ref[...].astype(jnp.float32)
            t = t_ref[...].astype(jnp.float32)
            if needs_mask:
                # Only the last real block is partial; the mask path is only
                # generated when the row count is actually ragged.
                blk = s * steps + j
                row = lax.broadcasted_iota(jnp.int32, (tile_rows, _LANES), 0)
                valid = (blk * tile_rows + row) < rows_arr
                # (p=1, t=1) contributes exactly 0 to both partial sums
                # (clamp happens before the multiply: 0 * -100 = 0).
                p = jnp.where(valid, p, 1.0)
                t = jnp.where(valid, t, 1.0)

            one_m_p = 1.0 - p
            # nn.BCELoss clamps each log term at -100 before combining.
            log_p = jnp.maximum(jnp.log(p), -100.0)
            log_1mp = jnp.maximum(jnp.log(one_m_p), -100.0)
            # Negative of the per-element BCE: t*log(p) + (1-t)*log(1-p).
            neg_bce = log_1mp + t * (log_p - log_1mp)
            # gamma == 2.0 -> explicit squares on the VPU (jnp.power would hit
            # the single EUP slot with exp+log per element).
            p_sq = p * p
            w_elem = p_sq + t * (ALPHA * (one_m_p * one_m_p) - p_sq)

            # VALU-only cross-vreg partial reduce into (8,128) accumulators;
            # the lane/sublane (XLU) reduction happens once, in the wrapper.
            acc_bce_ref[...] += jnp.sum(
                neg_bce.reshape(-1, _SUBLANES, _LANES), axis=0)
            acc_w_ref[...] += jnp.sum(
                w_elem.reshape(-1, _SUBLANES, _LANES), axis=0)

        if blocks_even:
            _accumulate()
        else:
            # Trailing split re-reads a clamped duplicate block; skip its math.
            pl.when(s * steps + j < total_blocks)(_accumulate)

        @pl.when(j == pl.num_programs(1) - 1)
        def _finalize():
            bce_out_ref[...] = -acc_bce_ref[...]
            w_out_ref[...] = acc_w_ref[...]

    return kernel


def bce_focal_loss(preds, targets):
    assert preds.shape == targets.shape
    n = preds.size

    rows_arr = -(-n // _LANES)
    padded_n = rows_arr * _LANES

    if padded_n == n:
        # Common case: no pad, no copy — reshape straight to the lane-dense view.
        p2d = preds.reshape(rows_arr, _LANES)
        t2d = targets.reshape(rows_arr, _LANES)
    else:
        # Rare ragged-lane tail (n % 128 != 0): minimal pad (<=127 elems) with
        # (p=1, t=1), which contributes exactly 0 to both partial sums.
        pad = padded_n - n
        p2d = jnp.pad(preds.reshape(-1), (0, pad),
                      constant_values=1).reshape(rows_arr, _LANES)
        t2d = jnp.pad(targets.reshape(-1), (0, pad),
                      constant_values=1).reshape(rows_arr, _LANES)

    tile_rows = min(
        _MAX_TILE_ROWS,
        _round_up(max(-(-rows_arr // _NUM_SPLITS), 1), _SUBLANES))
    total_blocks = -(-rows_arr // tile_rows)
    steps = -(-total_blocks // _NUM_SPLITS)

    kernel = _make_kernel(steps, total_blocks, tile_rows, rows_arr)

    if steps * _NUM_SPLITS == total_blocks:
        in_map = lambda s, j: (s * steps + j, 0)
    else:
        last_blk = total_blocks - 1
        in_map = lambda s, j: (jnp.minimum(s * steps + j, last_blk), 0)
    out_map = lambda s, j: (s, 0)

    out_rows = _NUM_SPLITS * _SUBLANES
    in_bytes = (p2d.size * p2d.dtype.itemsize
                + t2d.size * t2d.dtype.itemsize)
    cost = pl.CostEstimate(
        flops=15 * padded_n,
        transcendentals=2 * padded_n,
        bytes_accessed=in_bytes + 2 * out_rows * _LANES * 4,
    )

    bce_part, w_part = pl.pallas_call(
        kernel,
        out_shape=(
            jax.ShapeDtypeStruct((out_rows, _LANES), jnp.float32),
            jax.ShapeDtypeStruct((out_rows, _LANES), jnp.float32),
        ),
        grid_spec=pltpu.PrefetchScalarGridSpec(
            num_scalar_prefetch=0,
            grid=(_NUM_SPLITS, steps),
            in_specs=[
                pl.BlockSpec((tile_rows, _LANES), in_map),
                pl.BlockSpec((tile_rows, _LANES), in_map),
            ],
            out_specs=[
                pl.BlockSpec((_SUBLANES, _LANES), out_map),
                pl.BlockSpec((_SUBLANES, _LANES), out_map),
            ],
            scratch_shapes=[
                pltpu.VMEM((_SUBLANES, _LANES), jnp.float32),
                pltpu.VMEM((_SUBLANES, _LANES), jnp.float32),
            ],
        ),
        compiler_params=pltpu.CompilerParams(
            # "parallel" on axis 0 lets v7x's two TensorCores each stream half
            # the rows; on single-TC v5e/v6e it degrades to a serial loop.
            dimension_semantics=("parallel", "arbitrary"),
        ),
        cost_estimate=cost,
    )(p2d, t2d)

    bce_mean = jnp.sum(bce_part) / n   # scalar nn.BCELoss (mean reduction)
    w_mean = jnp.sum(w_part) / n       # mean focal weighting factor
    return bce_mean * w_mean


def _reference(preds, targets):
    p = preds.astype(jnp.float32)
    t = targets.astype(jnp.float32)
    bce = jnp.mean(-(t * jnp.maximum(jnp.log(p), -100.0)
                     + (1.0 - t) * jnp.maximum(jnp.log(1.0 - p), -100.0)))
    loss = t * ALPHA * (1.0 - p) ** GAMMA * bce + (1.0 - t) * p ** GAMMA * bce
    return jnp.mean(loss)


if __name__ == "__main__":
    key = jax.random.PRNGKey(0)
    k1, k2 = jax.random.split(key)
    shape = (2, 4, 16, 16)  # NCHW
    # preds must be in (0, 1) for BCELoss; targets are binary labels.
    preds = jax.nn.sigmoid(jax.random.normal(k1, shape, dtype=jnp.float32))
    targets = (jax.random.uniform(k2, shape) > 0.5).astype(jnp.float32)

    out = bce_focal_loss(preds, targets)
    out = jax.block_until_ready(out)

    ref = jax.block_until_ready(_reference(preds, targets))
    assert jnp.allclose(out, ref, rtol=1e-5, atol=1e-6), (out, ref)
    print("KERNEL_OK")
</pallas_src>

<mosaic_0001>
module attributes {stable_mosaic.version = 11 : i64} {
  func.func @kernel(%arg0: i32, %arg1: i32, %arg2: memref<8x128xf32, #tpu.memory_space<vmem>>, %arg3: memref<8x128xf32, #tpu.memory_space<vmem>>, %arg4: memref<8x128xf32, #tpu.memory_space<vmem>>, %arg5: memref<8x128xf32, #tpu.memory_space<vmem>>, %arg6: memref<8x128xf32, #tpu.memory_space<vmem>>, %arg7: memref<8x128xf32, #tpu.memory_space<vmem>>) attributes {dimension_semantics = [#tpu.dimension_semantics<parallel>, #tpu.dimension_semantics<arbitrary>], iteration_bounds = array<i64: 2, 1>, scalar_prefetch = 0 : i64, scratch_operands = 2 : i64, tpu.core_type = #tpu.core_type<tc>, window_params = [{transform_indices = @transform_0, window_bounds = array<i64: 8, 128>}, {transform_indices = @transform_1, window_bounds = array<i64: 8, 128>}, {transform_indices = @transform_2, window_bounds = array<i64: 8, 128>}, {transform_indices = @transform_3, window_bounds = array<i64: 8, 128>}]} {
    %c0_i32 = arith.constant 0 : i32
    %0 = arith.cmpi eq, %arg1, %c0_i32 : i32
    %1 = arith.extui %0 : i1 to i32
    %c0_i32_0 = arith.constant 0 : i32
    %2 = arith.cmpi ne, %1, %c0_i32_0 : i32
    scf.if %2 {
      %cst_19 = arith.constant 0.000000e+00 : f32
      %36 = vector.broadcast %cst_19 : f32 to vector<8x128xf32>
      %c0_20 = arith.constant 0 : index
      %c0_21 = arith.constant 0 : index
      %37 = vector.load %arg6[%c0_20, %c0_21] : memref<8x128xf32, #tpu.memory_space<vmem>>, vector<8x128xf32>
      tpu.vector_store %arg6[%c0_20, %c0_21], %36 {strides = array<i32>} : memref<8x128xf32, #tpu.memory_space<vmem>>, vector<8x128xf32>,
      %cst_22 = arith.constant 0.000000e+00 : f32
      %38 = vector.broadcast %cst_22 : f32 to vector<8x128xf32>
      %c0_23 = arith.constant 0 : index
      %c0_24 = arith.constant 0 : index
      %39 = vector.load %arg7[%c0_23, %c0_24] : memref<8x128xf32, #tpu.memory_space<vmem>>, vector<8x128xf32>
      tpu.vector_store %arg7[%c0_23, %c0_24], %38 {strides = array<i32>} : memref<8x128xf32, #tpu.memory_space<vmem>>, vector<8x128xf32>,
    } else {
    }
    %c0 = arith.constant 0 : index
    %c0_1 = arith.constant 0 : index
    %3 = vector.load %arg2[%c0, %c0_1] : memref<8x128xf32, #tpu.memory_space<vmem>>, vector<8x128xf32>
    %c0_2 = arith.constant 0 : index
    %c0_3 = arith.constant 0 : index
    %4 = vector.load %arg3[%c0_2, %c0_3] : memref<8x128xf32, #tpu.memory_space<vmem>>, vector<8x128xf32>
    %cst = arith.constant 1.000000e+00 : f32
    %5 = vector.broadcast %cst : f32 to vector<8x128xf32>
    %6 = arith.subf %5, %3 : vector<8x128xf32>
    %7 = math.log %3 : vector<8x128xf32>
    %cst_4 = arith.constant -1.000000e+02 : f32
    %8 = vector.broadcast %cst_4 : f32 to vector<8x128xf32>
    %9 = arith.maximumf %7, %8 : vector<8x128xf32>
    %10 = math.log %6 : vector<8x128xf32>
    %cst_5 = arith.constant -1.000000e+02 : f32
    %11 = vector.broadcast %cst_5 : f32 to vector<8x128xf32>
    %12 = arith.maximumf %10, %11 : vector<8x128xf32>
    %13 = arith.subf %9, %12 : vector<8x128xf32>
    %14 = arith.mulf %4, %13 : vector<8x128xf32>
    %15 = arith.addf %12, %14 : vector<8x128xf32>
    %16 = arith.mulf %3, %3 : vector<8x128xf32>
    %17 = arith.mulf %6, %6 : vector<8x128xf32>
    %cst_6 = arith.constant 2.500000e-01 : f32
    %18 = vector.broadcast %cst_6 : f32 to vector<8x128xf32>
    %19 = arith.mulf %18, %17 : vector<8x128xf32>
    %20 = arith.subf %19, %16 : vector<8x128xf32>
    %21 = arith.mulf %4, %20 : vector<8x128xf32>
    %22 = arith.addf %16, %21 : vector<8x128xf32>
    %c0_7 = arith.constant 0 : index
    %c0_8 = arith.constant 0 : index
    %23 = vector.load %arg6[%c0_7, %c0_8] : memref<8x128xf32, #tpu.memory_space<vmem>>, vector<8x128xf32>
    %24 = vector.shape_cast %15 : vector<8x128xf32> to vector<1x8x128xf32>
    %cst_9 = arith.constant dense<0.000000e+00> : vector<8x128xf32>
    %25 = vector.multi_reduction <add>, %24, %cst_9 [0] : vector<1x8x128xf32> to vector<8x128xf32>
    %26 = arith.addf %23, %25 : vector<8x128xf32>
    %c0_10 = arith.constant 0 : index
    %c0_11 = arith.constant 0 : index
    %27 = vector.load %arg6[%c0_10, %c0_11] : memref<8x128xf32, #tpu.memory_space<vmem>>, vector<8x128xf32>
    tpu.vector_store %arg6[%c0_10, %c0_11], %26 {strides = array<i32>} : memref<8x128xf32, #tpu.memory_space<vmem>>, vector<8x128xf32>,
    %c0_12 = arith.constant 0 : index
    %c0_13 = arith.constant 0 : index
    %28 = vector.load %arg7[%c0_12, %c0_13] : memref<8x128xf32, #tpu.memory_space<vmem>>, vector<8x128xf32>
    %29 = vector.shape_cast %22 : vector<8x128xf32> to vector<1x8x128xf32>
    %cst_14 = arith.constant dense<0.000000e+00> : vector<8x128xf32>
    %30 = vector.multi_reduction <add>, %29, %cst_14 [0] : vector<1x8x128xf32> to vector<8x128xf32>
    %31 = arith.addf %28, %30 : vector<8x128xf32>
    %c0_15 = arith.constant 0 : index
    %c0_16 = arith.constant 0 : index
    %32 = vector.load %arg7[%c0_15, %c0_16] : memref<8x128xf32, #tpu.memory_space<vmem>>, vector<8x128xf32>
    tpu.vector_store %arg7[%c0_15, %c0_16], %31 {strides = array<i32>} : memref<8x128xf32, #tpu.memory_space<vmem>>, vector<8x128xf32>,
    %c0_i32_17 = arith.constant 0 : i32
    %33 = arith.cmpi eq, %arg1, %c0_i32_17 : i32
    %34 = arith.extui %33 : i1 to i32
    %c0_i32_18 = arith.constant 0 : i32
    %35 = arith.cmpi ne, %34, %c0_i32_18 : i32
    scf.if %35 {
      %c0_19 = arith.constant 0 : index
      %c0_20 = arith.constant 0 : index
      %36 = vector.load %arg6[%c0_19, %c0_20] : memref<8x128xf32, #tpu.memory_space<vmem>>, vector<8x128xf32>
      %cst_21 = arith.constant 0.000000e+00 : f32
      %37 = vector.broadcast %cst_21 : f32 to vector<8x128xf32>
      %38 = arith.subf %37, %36 : vector<8x128xf32>
      %c0_22 = arith.constant 0 : index
      %c0_23 = arith.constant 0 : index
      %39 = vector.load %arg4[%c0_22, %c0_23] : memref<8x128xf32, #tpu.memory_space<vmem>>, vector<8x128xf32>
      tpu.vector_store %arg4[%c0_22, %c0_23], %38 {strides = array<i32>} : memref<8x128xf32, #tpu.memory_space<vmem>>, vector<8x128xf32>,
      %c0_24 = arith.constant 0 : index
      %c0_25 = arith.constant 0 : index
      %40 = vector.load %arg7[%c0_24, %c0_25] : memref<8x128xf32, #tpu.memory_space<vmem>>, vector<8x128xf32>
      %c0_26 = arith.constant 0 : index
      %c0_27 = arith.constant 0 : index
      %41 = vector.load %arg5[%c0_26, %c0_27] : memref<8x128xf32, #tpu.memory_space<vmem>>, vector<8x128xf32>
      tpu.vector_store %arg5[%c0_26, %c0_27], %40 {strides = array<i32>} : memref<8x128xf32, #tpu.memory_space<vmem>>, vector<8x128xf32>,
    } else {
    }
    return
  }
  func.func @transform_0(%arg0: i32, %arg1: i32) -> (i32, i32) {
    %c1_i32 = arith.constant 1 : i32
    %0 = arith.muli %arg0, %c1_i32 : i32
    %1 = arith.addi %0, %arg1 : i32
    %c0_i32 = arith.constant 0 : i32
    %c0_i32_0 = arith.constant 0 : i32
    return %1, %c0_i32 : i32, i32
  }
  func.func @transform_1(%arg0: i32, %arg1: i32) -> (i32, i32) {
    %c1_i32 = arith.constant 1 : i32
    %0 = arith.muli %arg0, %c1_i32 : i32
    %1 = arith.addi %0, %arg1 : i32
    %c0_i32 = arith.constant 0 : i32
    %c0_i32_0 = arith.constant 0 : i32
    return %1, %c0_i32 : i32, i32
  }
  func.func @transform_2(%arg0: i32, %arg1: i32) -> (i32, i32) {
    %c0_i32 = arith.constant 0 : i32
    %c0_i32_0 = arith.constant 0 : i32
    return %arg0, %c0_i32 : i32, i32
  }
  func.func @transform_3(%arg0: i32, %arg1: i32) -> (i32, i32) {
    %c0_i32 = arith.constant 0 : i32
    %c0_i32_0 = arith.constant 0 : i32
    return %arg0, %c0_i32 : i32, i32
  }
}

</mosaic_0001>

<llo_original>
// kernel: tpu_custom_call.1
$region0: #{tpu_custom_call.1}
  #allocation0 [shape = 'u32[]', space=smem, size = 0x4, offset = 0x4, fixed_abs, tag = 'smem constant byte address 0x4 - core index']
  #allocation1 [shape = 'u32[144,128]{1,0:T(1,128)}', space=vmem, size = 0x12000, scoped, tag = 'internal scratch']
  #allocation2 [shape = 'f32[8,128]{1,0:T(8,128)}', space=vmem, size = 0x1000, scoped, tag = 'scratch operand']
  #allocation3 [shape = 'f32[8,128]{1,0:T(8,128)}', space=vmem, size = 0x1000, scoped, tag = 'scratch operand']
  %s0 = inlined_call_operand.hbm [shape: f32[16,128], index: 0, kind: input, shape index: {}]
  %s1 = inlined_call_operand.hbm [shape: f32[16,128], index: 1, kind: input, shape index: {}]
  %s2 = inlined_call_operand.hbm [shape: f32[16,128], index: 2, kind: output, shape index: {0}]
  %s3 = inlined_call_operand.hbm [shape: f32[16,128], index: 3, kind: output, shape index: {1}]
  %4 = xla_tuple %s2, %s3
  %s5 = sld [smem:[#allocation0]]
  $region65: #{tpu_custom_call.1} parent=0
    _
  %s7 = ssub.s32 1, %s5
  %s8 = scalar_select 0, %s7, %s5
  $region1: #{tpu_custom_call.1} parent=0
    #allocation4 [shape = 'u8[8192]{0}', space=vmem, size = 0x2000, scoped, tag = 'input window, operand 0']
    #allocation5 [shape = 's32[2]{0}', space=sflag, size = 0x8, scoped, tag = 'scoped memory for tpu_custom_call.1']
    #allocation6 [shape = 's32[2]{0}', space=sflag, size = 0x8, scoped, tag = 'scoped memory for tpu_custom_call.1']
    #allocation7 [shape = 'u8[8192]{0}', space=vmem, size = 0x2000, scoped, tag = 'input window, operand 1']
    #allocation8 [shape = 's32[2]{0}', space=sflag, size = 0x8, scoped, tag = 'scoped memory for tpu_custom_call.1']
    #allocation9 [shape = 'u8[8192]{0}', space=vmem, size = 0x2000, scoped, tag = 'output window, operand 0']
    #allocation10 [shape = 'u8[8192]{0}', space=vmem, size = 0x2000, scoped, tag = 'output window, operand 1']
    #allocation11 [shape = 's32[2]{0}', space=sflag, size = 0x8, scoped, tag = 'scoped memory for tpu_custom_call.1']
    %9 = vsyncpa [#allocation5], 0
    %s10 = scalar_lea.sflag [#allocation5], 1
    %11 = vsyncpa %s10, 0
    %12 = vsyncpa [#allocation8], 0
    %s13 = scalar_lea.sflag [#allocation8], 1
    %14 = vsyncpa %s13, 0
    %15 = vsyncpa [#allocation6], 0
    %s16 = scalar_lea.sflag [#allocation6], 1
    %17 = vsyncpa %s16, 0
    %18 = vsyncpa [#allocation11], 0
    %s19 = scalar_lea.sflag [#allocation11], 1
    %20 = vsyncpa %s19, 0
    loop: start=0, step=1, limit=4
    $region2: #{tpu_custom_call.1} parent=1 // loop_pre_header
      _
    $region3: #{tpu_custom_call.1} parent=1 // loop_header
      %s22 = sphi 0, %s26
      %p23 = scmp.ge.s32.totalorder %s22, 4
      %s29 = sphi 0, %s41
      %s30 = sphi 0, %s37
      %s31 = sphi 0, %s29
      %s32 = sphi 0, %s30
      %s33 = sphi 0, %s31
      %s34 = sphi 0, %s32
      %s46 = sphi 0, %s48
      %s49 = sphi 0, %s46
      %s50 = sphi 0, %s49
      %s66 = sphi 0, %s50
      %s74 = sphi 0, %s76
      %s77 = sphi 0, %s74
      %s78 = sphi 0, %s77
      %s94 = sphi 0, %s78
      %s100 = sphi 0, %s102
      %s103 = sphi 0, %s100
      %s104 = sphi 0, %s103
      %s120 = sphi 0, %s104
      %s126 = sphi 0, %s128
      %s129 = sphi 0, %s126
      %s130 = sphi 0, %s129
      %s146 = sphi 0, %s130
    $region4: #{tpu_custom_call.1} parent=1 // loop_header_branch
      %25 = sbr.rel (%p23) target = $region8
    $region5: #{tpu_custom_call.1} parent=1 // loop_body
      %s27 = ssub.s32 %s22, 1
      %s28 = ssub.s32 %s22, 2
      %s35 = sadd.s32 1, %s30
      %p36 = scmp.ge.s32.totalorder %s35, 1
      %s37 = scalar_select %p36, 0, %s35
      %s38 = sadd.s32 1, %s29
      %s39 = scalar_select %p36, %s38, %s29
      %p40 = scmp.ge.s32.totalorder %s39, 2
      %s41 = scalar_select %p40, 0, %s39
      %s42 = sadd.s32 %s29, %s30
      %s43 = sadd.s32 %s41, %s37
      %s44 = ssub.s32 %s42, %s43
      %p45 = scmp.eq.s32.totalorder %s44, 0
      %s47 = sadd.s32 %s46, 1
      %s48 = scalar_select %p45, %s46, %s47
      %p51 = pneg %p45
      %p52 = scmp.eq.s32.totalorder %s22, 1
      %p53 = por %p51, %p52
      %p54 = scmp.ne.s32.totalorder %s46, %s49
      %p55 = scmp.eq.s32.totalorder %s22, 0
      %p56 = por %p54, %p55
      %p57 = scmp.ne.s32.totalorder %s46, %s49
      %p58 = scmp.eq.s32.totalorder %s27, 1
      %p59 = por %p57, %p58
      %p60 = scmp.ne.s32.totalorder %s49, %s50
      %p61 = scmp.eq.s32.totalorder %s27, 0
      %p62 = por %p60, %p61
      %p63 = scmp.ne.s32.totalorder %s49, %s50
      %p64 = scmp.eq.s32.totalorder %s28, 1
      %p65 = por %p63, %p64
      %p67 = scmp.ne.s32.totalorder %s50, %s66
      %p68 = scmp.eq.s32.totalorder %s28, 0
      %p69 = por %p67, %p68
      %s70 = sadd.s32 %s29, %s30
      %s71 = sadd.s32 %s41, %s37
      %s72 = ssub.s32 %s70, %s71
      %p73 = scmp.eq.s32.totalorder %s72, 0
      %s75 = sadd.s32 %s74, 1
      %s76 = scalar_select %p73, %s74, %s75
      %p79 = pneg %p73
      %p80 = scmp.eq.s32.totalorder %s22, 1
      %p81 = por %p79, %p80
      %p82 = scmp.ne.s32.totalorder %s74, %s77
      %p83 = scmp.eq.s32.totalorder %s22, 0
      %p84 = por %p82, %p83
      %p85 = scmp.ne.s32.totalorder %s74, %s77
      %p86 = scmp.eq.s32.totalorder %s27, 1
      %p87 = por %p85, %p86
      %p88 = scmp.ne.s32.totalorder %s77, %s78
      %p89 = scmp.eq.s32.totalorder %s27, 0
      %p90 = por %p88, %p89
      %p91 = scmp.ne.s32.totalorder %s77, %s78
      %p92 = scmp.eq.s32.totalorder %s28, 1
      %p93 = por %p91, %p92
      %p95 = scmp.ne.s32.totalorder %s78, %s94
      %p96 = scmp.eq.s32.totalorder %s28, 0
      %p97 = por %p95, %p96
      %s98 = ssub.s32 %s29, %s41
      %p99 = scmp.eq.s32.totalorder %s98, 0
      %s101 = sadd.s32 %s100, 1
      %s102 = scalar_select %p99, %s100, %s101
      %p105 = pneg %p99
      %p106 = scmp.eq.s32.totalorder %s22, 1
      %p107 = por %p105, %p106
      %p108 = scmp.ne.s32.totalorder %s100, %s103
      %p109 = scmp.eq.s32.totalorder %s22, 0
      %p110 = por %p108, %p109
      %p111 = scmp.ne.s32.totalorder %s100, %s103
      %p112 = scmp.eq.s32.totalorder %s27, 1
      %p113 = por %p111, %p112
      %p114 = scmp.ne.s32.totalorder %s103, %s104
      %p115 = scmp.eq.s32.totalorder %s27, 0
      %p116 = por %p114, %p115
      %p117 = scmp.ne.s32.totalorder %s103, %s104
      %p118 = scmp.eq.s32.totalorder %s28, 1
      %p119 = por %p117, %p118
      %p121 = scmp.ne.s32.totalorder %s104, %s120
      %p122 = scmp.eq.s32.totalorder %s28, 0
      %p123 = por %p121, %p122
      %s124 = ssub.s32 %s29, %s41
      %p125 = scmp.eq.s32.totalorder %s124, 0
      %s127 = sadd.s32 %s126, 1
      %s128 = scalar_select %p125, %s126, %s127
      %p131 = pneg %p125
      %p132 = scmp.eq.s32.totalorder %s22, 1
      %p133 = por %p131, %p132
      %p134 = scmp.ne.s32.totalorder %s126, %s129
      %p135 = scmp.eq.s32.totalorder %s22, 0
      %p136 = por %p134, %p135
      %p137 = scmp.ne.s32.totalorder %s126, %s129
      %p138 = scmp.eq.s32.totalorder %s27, 1
      %p139 = por %p137, %p138
      %p140 = scmp.ne.s32.totalorder %s129, %s130
      %p141 = scmp.eq.s32.totalorder %s27, 0
      %p142 = por %p140, %p141
      %p143 = scmp.ne.s32.totalorder %s129, %s130
      %p144 = scmp.eq.s32.totalorder %s28, 1
      %p145 = por %p143, %p144
      %p147 = scmp.ne.s32.totalorder %s130, %s146
      %p148 = scmp.eq.s32.totalorder %s28, 0
      %p149 = por %p147, %p148
      %p150 = scmp.le.s32.totalorder 1, %s22
      %p151 = scmp.lt.s32.totalorder %s22, 3
      %p152 = pnand %p150, %p151
      %p153 = pneg %p152
      // Predicated region
      $region9: #{tpu_custom_call.1} parent=5 // pred_check
        _
      $region10: #{tpu_custom_call.1} parent=5 // pred_check_branch
        %155 = sbr.rel (%p152) target = $region12
      $region11: #{tpu_custom_call.1} parent=5 // pred_region
        %s156 = ssub.s32 %s22, 1
      $region12: #{tpu_custom_call.1} parent=5 // pred_fallthru
        _
      %p157 = scmp.lt.s32.totalorder %s22, 2
      // Predicated region
      $region13: #{tpu_custom_call.1} parent=5 // pred_check
        %p158 = pneg %p157
      $region14: #{tpu_custom_call.1} parent=5 // pred_check_branch
        %160 = sbr.rel (%p158) target = $region16
      $region15: #{tpu_custom_call.1} parent=5 // pred_region
        // Predicated region
        $region17: #{tpu_custom_call.1} parent=15 // pred_check
          %p161 = pneg %p56
        $region18: #{tpu_custom_call.1} parent=15 // pred_check_branch
          %163 = sbr.rel (%p161) target = $region20
        $region19: #{tpu_custom_call.1} parent=15 // pred_region
          %s164 = sand.u32 %s46, 1
          %s165 = scalar_lea.sflag [#allocation5], %s164
          %s166 = sand.u32 %s46, 1
          %s167 = smul.addr %s166, 8
          %s168 = scalar_lea.vmem [#allocation4], %s167
          %s169 = sadd.s32 %s29, %s30
          %s171 = ssub.s32 128, 128
          %172 = vsyncadd %s165, %s171
          %s173 = smul.addr %s169, 128
          %s174 = scalar_lea.hbm %s0, %s173
          %s176 = sshll.u32 %s168, 4
          %s177 = int_to_ptr.vmem [resolvable:$true] %s176
          %179 = dma.hbm_to_vmem [thread:$0]  %s174, 128, %s177, %s165
        $region20: #{tpu_custom_call.1} parent=15 // pred_fallthru
          _
        // Predicated region
        $region21: #{tpu_custom_call.1} parent=15 // pred_check
          %p180 = pneg %p84
        $region22: #{tpu_custom_call.1} parent=15 // pred_check_branch
          %182 = sbr.rel (%p180) target = $region24
        $region23: #{tpu_custom_call.1} parent=15 // pred_region
          %s183 = sand.u32 %s74, 1
          %s184 = scalar_lea.sflag [#allocation8], %s183
          %s185 = sand.u32 %s74, 1
          %s186 = smul.addr %s185, 8
          %s187 = scalar_lea.vmem [#allocation7], %s186
          %s188 = sadd.s32 %s29, %s30
          %s190 = ssub.s32 128, 128
          %191 = vsyncadd %s184, %s190
          %s192 = smul.addr %s188, 128
          %s193 = scalar_lea.hbm %s1, %s192
          %s195 = sshll.u32 %s187, 4
          %s196 = int_to_ptr.vmem [resolvable:$true] %s195
          %198 = dma.hbm_to_vmem [thread:$0]  %s193, 128, %s196, %s184
        $region24: #{tpu_custom_call.1} parent=15 // pred_fallthru
          _
      $region16: #{tpu_custom_call.1} parent=5 // pred_fallthru
        _
      %p199 = scmp.le.s32.totalorder 1, %s22
      %p200 = scmp.lt.s32.totalorder %s22, 3
      %p201 = pnand %p199, %p200
      %p202 = pneg %p201
      // Predicated region
      $region25: #{tpu_custom_call.1} parent=5 // pred_check
        _
      $region26: #{tpu_custom_call.1} parent=5 // pred_check_branch
        %204 = sbr.rel (%p201) target = $region28
      $region27: #{tpu_custom_call.1} parent=5 // pred_region
        %s205 = ssub.s32 %s22, 1
        %s206 = sand.u32 %s49, 1
        %s207 = scalar_lea.sflag [#allocation5], %s206
        %s208 = sand.u32 %s49, 1
        %s209 = smul.addr %s208, 8
        %s210 = scalar_lea.vmem [#allocation4], %s209
        // Predicated region
        $region29: #{tpu_custom_call.1} parent=27 // pred_check
          %p211 = pneg %p62
        $region30: #{tpu_custom_call.1} parent=27 // pred_check_branch
          %213 = sbr.rel (%p211) target = $region32
        $region31: #{tpu_custom_call.1} parent=27 // pred_region
          %214 = dma.done %s207, 128
        $region32: #{tpu_custom_call.1} parent=27 // pred_fallthru
          _
        %s215 = sand.u32 %s77, 1
        %s216 = scalar_lea.sflag [#allocation8], %s215
        %s217 = sand.u32 %s77, 1
        %s218 = smul.addr %s217, 8
        %s219 = scalar_lea.vmem [#allocation7], %s218
        // Predicated region
        $region33: #{tpu_custom_call.1} parent=27 // pred_check
          %p220 = pneg %p90
        $region34: #{tpu_custom_call.1} parent=27 // pred_check_branch
          %222 = sbr.rel (%p220) target = $region36
        $region35: #{tpu_custom_call.1} parent=27 // pred_region
          %223 = dma.done %s216, 128
        $region36: #{tpu_custom_call.1} parent=27 // pred_fallthru
          _
        %s224 = sand.u32 %s49, 1
        %s225 = scalar_lea.sflag [#allocation5], %s224
        %s226 = sand.u32 %s49, 1
        %s227 = smul.addr %s226, 8
        %s228 = scalar_lea.vmem [#allocation4], %s227
        %p229 = pneg %p62
        %p230 = pneg %p59
        %s231 = sand.u32 %s77, 1
        %s232 = scalar_lea.sflag [#allocation8], %s231
        %s233 = sand.u32 %s77, 1
        %s234 = smul.addr %s233, 8
        %s235 = scalar_lea.vmem [#allocation7], %s234
        %p236 = pneg %p90
        %p237 = pneg %p87
        %p238 = pneg %p116
        %p239 = pneg %p113
        %s240 = sand.u32 %s103, 1
        %s241 = scalar_lea.sflag [#allocation6], %s240
        %s242 = sand.u32 %s103, 1
        %s243 = smul.addr %s242, 8
        %s244 = scalar_lea.vmem [#allocation9], %s243
        %p245 = pneg %p142
        %p246 = pneg %p139
        %s247 = sand.u32 %s129, 1
        %s248 = scalar_lea.sflag [#allocation11], %s247
        %s249 = sand.u32 %s129, 1
        %s250 = smul.addr %s249, 8
        %s251 = scalar_lea.vmem [#allocation10], %s250
        %s252 = sadd.s32 %s31, %s32
        %s253 = sadd.s32 %s31, %s32
        %p254 = scmp.eq.s32.totalorder %s32, 0
        // Predicated region
        $region37: #{tpu_custom_call.1} parent=27 // pred_check
          %p255 = pneg %p254
        $region38: #{tpu_custom_call.1} parent=27 // pred_check_branch
          %257 = sbr.rel (%p255) target = $region40
        $region39: #{tpu_custom_call.1} parent=27 // pred_region
          %258 = vst [vmem:[#allocation2] sm:$0xff] 0.0
          %259 = vst [vmem:[#allocation3] sm:$0xff] 0.0
        $region40: #{tpu_custom_call.1} parent=27 // pred_fallthru
          _
        %v260 = vld [vmem:[%s210] sm:$0xff]
        %v261 = vld [vmem:[%s219] sm:$0xff]
        %v262 = vsub.f32 1.0, %v260
        %v263 = vlog2.pop %v260
        %v264 = vmul.f32 %v263, 0.6931472
        %v265 = vmax.f32 %v264, -100.0
        %v266 = vlog2.pop %v262
        %v267 = vmul.f32 %v266, 0.6931472
        %v268 = vmax.f32 %v267, -100.0
        %v269 = vsub.f32 %v265, %v268
        %v270 = vmul.f32 %v261, %v269
        %v271 = vadd.f32 %v268, %v270
        %v272 = vmul.f32 %v260, %v260
        %v273 = vmul.f32 %v262, %v262
        %v274 = vmul.f32 %v273, 0.25
        %v275 = vsub.f32 %v274, %v272
        %v276 = vmul.f32 %v261, %v275
        %v277 = vadd.f32 %v272, %v276
        %v278 = vld [vmem:[#allocation2] sm:$0xff]
        %v279 = vadd.f32 %v271, 0.0
        %v280 = vadd.f32 %v278, %v279
        %281 = vst [vmem:[#allocation2] sm:$0xff] %v280
        %v282 = vld [vmem:[#allocation3] sm:$0xff]
        %v283 = vadd.f32 %v277, 0.0
        %v284 = vadd.f32 %v282, %v283
        %285 = vst [vmem:[#allocation3] sm:$0xff] %v284
        // Predicated region
        $region41: #{tpu_custom_call.1} parent=27 // pred_check
          %p286 = pneg %p254
        $region42: #{tpu_custom_call.1} parent=27 // pred_check_branch
          %288 = sbr.rel (%p286) target = $region44
        $region43: #{tpu_custom_call.1} parent=27 // pred_region
          %v289 = vld [vmem:[#allocation2] sm:$0xff]
          %v290 = vsub.f32 0.0, %v289
          %291 = vst [vmem:[%s244] sm:$0xff] %v290
          %v292 = vld [vmem:[#allocation3] sm:$0xff]
          %293 = vst [vmem:[%s251] sm:$0xff] %v292
        $region44: #{tpu_custom_call.1} parent=27 // pred_fallthru
          _
        %s294 = sand.u32 %s103, 1
        %s295 = scalar_lea.sflag [#allocation6], %s294
        %s296 = sand.u32 %s103, 1
        %s297 = smul.addr %s296, 8
        %s298 = scalar_lea.vmem [#allocation9], %s297
        %s299 = sand.u32 %s129, 1
        %s300 = scalar_lea.sflag [#allocation11], %s299
        %s301 = sand.u32 %s129, 1
        %s302 = smul.addr %s301, 8
        %s303 = scalar_lea.vmem [#allocation10], %s302
        // Predicated region
        $region45: #{tpu_custom_call.1} parent=27 // pred_check
          %p304 = pneg %p113
        $region46: #{tpu_custom_call.1} parent=27 // pred_check_branch
          %306 = sbr.rel (%p304) target = $region48
        $region47: #{tpu_custom_call.1} parent=27 // pred_region
          %s308 = ssub.s32 128, 128
          %309 = vsyncadd %s295, %s308
          %s310 = smul.addr %s31, 128
          %s311 = scalar_lea.hbm %s2, %s310
          %s313 = sshll.u32 %s298, 4
          %s314 = int_to_ptr.vmem [resolvable:$true] %s313
          %316 = dma.vmem_to_hbm [thread:$0]  %s314, 128, %s311, %s295
        $region48: #{tpu_custom_call.1} parent=27 // pred_fallthru
          _
        // Predicated region
        $region49: #{tpu_custom_call.1} parent=27 // pred_check
          %p317 = pneg %p139
        $region50: #{tpu_custom_call.1} parent=27 // pred_check_branch
          %319 = sbr.rel (%p317) target = $region52
        $region51: #{tpu_custom_call.1} parent=27 // pred_region
          %s321 = ssub.s32 128, 128
          %322 = vsyncadd %s300, %s321
          %s323 = smul.addr %s31, 128
          %s324 = scalar_lea.hbm %s3, %s323
          %s326 = sshll.u32 %s303, 4
          %s327 = int_to_ptr.vmem [resolvable:$true] %s326
          %329 = dma.vmem_to_hbm [thread:$0]  %s327, 128, %s324, %s300
        $region52: #{tpu_custom_call.1} parent=27 // pred_fallthru
          _
      $region28: #{tpu_custom_call.1} parent=5 // pred_fallthru
        _
      %p330 = scmp.le.s32.totalorder 2, %s22
      // Predicated region
      $region53: #{tpu_custom_call.1} parent=5 // pred_check
        %p331 = pneg %p330
      $region54: #{tpu_custom_call.1} parent=5 // pred_check_branch
        %333 = sbr.rel (%p331) target = $region56
      $region55: #{tpu_custom_call.1} parent=5 // pred_region
        %s334 = ssub.s32 %s22, 2
        // Predicated region
        $region57: #{tpu_custom_call.1} parent=55 // pred_check
          %p335 = pneg %p119
        $region58: #{tpu_custom_call.1} parent=55 // pred_check_branch
          %337 = sbr.rel (%p335) target = $region60
        $region59: #{tpu_custom_call.1} parent=55 // pred_region
          %s338 = sand.u32 %s104, 1
          %s339 = scalar_lea.sflag [#allocation6], %s338
          %s340 = sand.u32 %s104, 1
          %s341 = smul.addr %s340, 8
          %s342 = scalar_lea.vmem [#allocation9], %s341
          %343 = dma.done %s339, 128
        $region60: #{tpu_custom_call.1} parent=55 // pred_fallthru
          _
        // Predicated region
        $region61: #{tpu_custom_call.1} parent=55 // pred_check
          %p344 = pneg %p145
        $region62: #{tpu_custom_call.1} parent=55 // pred_check_branch
          %346 = sbr.rel (%p344) target = $region64
        $region63: #{tpu_custom_call.1} parent=55 // pred_region
          %s347 = sand.u32 %s130, 1
          %s348 = scalar_lea.sflag [#allocation11], %s347
          %s349 = sand.u32 %s130, 1
          %s350 = smul.addr %s349, 8
          %s351 = scalar_lea.vmem [#allocation10], %s350
          %352 = dma.done %s348, 128
        $region64: #{tpu_custom_call.1} parent=55 // pred_fallthru
          _
      $region56: #{tpu_custom_call.1} parent=5 // pred_fallthru
        _
    $region6: #{tpu_custom_call.1} parent=1 // loop_footer
      %s26 = sadd.s32 1, %s22
    $region7: #{tpu_custom_call.1} parent=1 // loop_footer_branch
      %21 = sbr.rel target = $region3
    $region8: #{tpu_custom_call.1} parent=1 // loop_exit
      _
    %353 = vsyncpa [#allocation5], 1
    %s354 = scalar_lea.sflag [#allocation5], 1
    %355 = vsyncpa %s354, 1
    %356 = vsyncpa [#allocation8], 1
    %s357 = scalar_lea.sflag [#allocation8], 1
    %358 = vsyncpa %s357, 1
    %359 = vsyncpa [#allocation6], 1
    %s360 = scalar_lea.sflag [#allocation6], 1
    %361 = vsyncpa %s360, 1
    %362 = vsyncpa [#allocation11], 1
    %s363 = scalar_lea.sflag [#allocation11], 1
    %364 = vsyncpa %s363, 1

</llo_original>
